<compile_context>
chip_gen: v6e
topology: v6e:2x2x1
jax: 0.10.0
libtpu: 0.0.40
codegen_flags: <defaults>
</compile_context>

<pallas_src>
import functools

import jax
import jax.numpy as jnp
from jax.experimental import pallas as pl
from jax.experimental.pallas import tpu as pltpu

LANE = 128     # TPU lane width: pad the feature dim to this for unmasked stores
SUBLANE = 8    # f32 sublane tile


def _round_up(v, m):
    return (v + m - 1) // m * m


def supernet_kernel(w_ref, xb_ref, out_ref, *, num_layers, n_rows):
    """Whole SuperNet in one invocation; all operands VMEM-resident.

    w_ref  : VMEM (L, Dp, Dp) bf16 -- fused per-layer weights [in, out], lane-dense
    xb_ref : VMEM (Np + L, Dp) f32 -- rows [0, Np)      : padded input activations
                                      rows [Np, Np + L) : fused per-layer biases (exact f32)
    out_ref: VMEM (Np, Dp)     f32 -- padded output activations (lane-dense, unmasked vst)
    """
    # Carry activations in bf16 (native MXU input); epilogue math stays f32.
    act = xb_ref[:n_rows, :].astype(jnp.bfloat16)
    y = None
    for l in range(num_layers):                       # static unroll; L is tiny
        y = jnp.dot(act, w_ref[l], preferred_element_type=jnp.float32)
        y = y + xb_ref[n_rows + l : n_rows + l + 1, :]   # f32 bias, broadcast over rows
        y = jnp.maximum(y, 0.0)                          # ReLU in f32
        act = y.astype(jnp.bfloat16)                     # bf16 carry into next matmul
    out_ref[...] = y.astype(out_ref.dtype)               # last layer stored from f32


def supernet_forward(x, params):
    """x: [B, S, D] float32.  params: dict of stacked per-layer parameters (eval mode)."""
    B, S, D = x.shape
    N = B * S
    L = params["w1"].shape[0]

    Dp = _round_up(max(D, LANE), LANE)   # lane-dense feature dim
    Np = _round_up(N, SUBLANE)           # sublane-aligned row count

    # --- tiny parameter glue, once, outside the hot path -------------------
    aw = jax.nn.softmax(params["arch"].astype(jnp.float32), axis=-1)   # (L, 2)
    s0 = aw[:, 0][:, None, None]
    s1 = aw[:, 1][:, None, None]
    w_eff = s0 * params["w1"] + s1 * params["w2"]                      # (L, D, D) f32
    b_eff = s0 * params["b1"] + s1 * params["b2"]                      # (L, 1, D) f32

    # Lane-dense, zero-padded bf16 weight slab (zero pad rows/cols keep the
    # padded lanes exactly zero through every layer).
    w_pad = jnp.zeros((L, Dp, Dp), jnp.float32).at[:, :D, :D].set(w_eff)
    w_pad = w_pad.astype(jnp.bfloat16)

    # Single f32 slab = padded activations followed by the L bias rows:
    # the kernel prologue issues 2 input DMAs (weights + this slab) instead of 3.
    xb = jnp.zeros((Np + L, Dp), jnp.float32)
    xb = xb.at[:N, :D].set(x.reshape(N, D))
    xb = xb.at[Np:, :D].set(b_eff[:, 0, :])

    kernel = functools.partial(supernet_kernel, num_layers=L, n_rows=Np)
    out_pad = pl.pallas_call(
        kernel,
        out_shape=jax.ShapeDtypeStruct((Np, Dp), x.dtype),
        in_specs=[
            pl.BlockSpec(memory_space=pltpu.MemorySpace.VMEM),  # fused weights
            pl.BlockSpec(memory_space=pltpu.MemorySpace.VMEM),  # x + biases slab
        ],
        out_specs=pl.BlockSpec(memory_space=pltpu.MemorySpace.VMEM),
    )(w_pad, xb)

    return out_pad[:N, :D].reshape(B, S, D)


def init_params(key, num_layers, d_model):
    """Deterministic synthetic init matching nn.Linear(d_model, d_model) shapes."""
    keys = jax.random.split(key, 4)
    bound = 1.0 / jnp.sqrt(d_model)
    # PyTorch Linear weight is [out, in]; we store transposed [in, out].
    w1 = jax.random.uniform(keys[0], (num_layers, d_model, d_model),
                            jnp.float32, -bound, bound)
    w2 = jax.random.uniform(keys[1], (num_layers, d_model, d_model),
                            jnp.float32, -bound, bound)
    b1 = jax.random.uniform(keys[2], (num_layers, 1, d_model),
                            jnp.float32, -bound, bound)
    b2 = jax.random.uniform(keys[3], (num_layers, 1, d_model),
                            jnp.float32, -bound, bound)
    # arch_weights initialized to ones(2)/2, as in the module.
    arch = jnp.full((num_layers, 2), 0.5, dtype=jnp.float32)
    return {"w1": w1, "b1": b1, "w2": w2, "b2": b2, "arch": arch}


def reference_forward(x, params):
    """Pure-JAX f32 reference of the PyTorch forward (eval mode)."""
    aw = jax.nn.softmax(params["arch"], axis=-1)
    out = x
    L = params["w1"].shape[0]
    for l in range(L):
        y1 = out @ params["w1"][l] + params["b1"][l]
        y2 = out @ params["w2"][l] + params["b2"][l]
        out = jax.nn.relu(aw[l, 0] * y1 + aw[l, 1] * y2)
    return out


if __name__ == "__main__":
    num_layers = 3
    d_model = 32
    batch, seq = 2, 8

    key = jax.random.PRNGKey(0)
    kx, kp = jax.random.split(key)
    x = jax.random.normal(kx, (batch, seq, d_model), dtype=jnp.float32)
    params = init_params(kp, num_layers, d_model)

    out = supernet_forward(x, params)
    out = jax.block_until_ready(out)

    ref = reference_forward(x, params)
    assert out.shape == (batch, seq, d_model)
    # Tolerance accounts for bf16 weights + bf16 activation carry feeding the
    # MXU (f32 accumulation, f32 bias/ReLU), compounded over num_layers.
    assert jnp.allclose(out, ref, rtol=3e-2, atol=3e-2), "mismatch vs reference"

    print("KERNEL_OK")
</pallas_src>

<mosaic_0001>
module attributes {stable_mosaic.version = 11 : i64} {
  func.func @supernet_kernel(%arg0: memref<3x128x128xbf16, #tpu.memory_space<vmem>>, %arg1: memref<19x128xf32, #tpu.memory_space<vmem>>, %arg2: memref<16x128xf32, #tpu.memory_space<vmem>>) attributes {dimension_semantics = [], scalar_prefetch = 0 : i64, scratch_operands = 0 : i64, tpu.core_type = #tpu.core_type<tc>} {
    %c0 = arith.constant 0 : index
    %c0_0 = arith.constant 0 : index
    %0 = vector.load %arg1[%c0, %c0_0] : memref<19x128xf32, #tpu.memory_space<vmem>>, vector<16x128xf32>
    %1 = arith.truncf %0 : vector<16x128xf32> to vector<16x128xbf16>
    %c0_1 = arith.constant 0 : index
    %c0_2 = arith.constant 0 : index
    %c0_3 = arith.constant 0 : index
    %2 = vector.load %arg0[%c0_1, %c0_2, %c0_3] : memref<3x128x128xbf16, #tpu.memory_space<vmem>>, vector<1x128x128xbf16>
    %3 = vector.shape_cast %2 : vector<1x128x128xbf16> to vector<128x128xbf16>
    %cst = arith.constant dense<0.000000e+00> : vector<16x128xf32>
    %4 = tpu.matmul %1, %3, %cst {dimension_numbers = #tpu.dot_dimension_numbers<[1], [0], [0], [1], [0, 0, 1, 1], [], []>} : vector<16x128xbf16>, vector<128x128xbf16>, vector<16x128xf32> -> vector<16x128xf32>
    %c16 = arith.constant 16 : index
    %c0_4 = arith.constant 0 : index
    %5 = vector.load %arg1[%c16, %c0_4] : memref<19x128xf32, #tpu.memory_space<vmem>>, vector<1x128xf32>
    %6 = vector.broadcast %5 : vector<1x128xf32> to vector<16x128xf32>
    %7 = arith.addf %4, %6 : vector<16x128xf32>
    %cst_5 = arith.constant 0.000000e+00 : f32
    %8 = vector.broadcast %cst_5 : f32 to vector<16x128xf32>
    %9 = arith.maximumf %7, %8 : vector<16x128xf32>
    %10 = arith.truncf %9 : vector<16x128xf32> to vector<16x128xbf16>
    %c1 = arith.constant 1 : index
    %c0_6 = arith.constant 0 : index
    %c0_7 = arith.constant 0 : index
    %11 = vector.load %arg0[%c1, %c0_6, %c0_7] : memref<3x128x128xbf16, #tpu.memory_space<vmem>>, vector<1x128x128xbf16>
    %12 = vector.shape_cast %11 : vector<1x128x128xbf16> to vector<128x128xbf16>
    %cst_8 = arith.constant dense<0.000000e+00> : vector<16x128xf32>
    %13 = tpu.matmul %10, %12, %cst_8 {dimension_numbers = #tpu.dot_dimension_numbers<[1], [0], [0], [1], [0, 0, 1, 1], [], []>} : vector<16x128xbf16>, vector<128x128xbf16>, vector<16x128xf32> -> vector<16x128xf32>
    %c17 = arith.constant 17 : index
    %c0_9 = arith.constant 0 : index
    %14 = vector.load %arg1[%c17, %c0_9] : memref<19x128xf32, #tpu.memory_space<vmem>>, vector<1x128xf32>
    %15 = vector.broadcast %14 : vector<1x128xf32> to vector<16x128xf32>
    %16 = arith.addf %13, %15 : vector<16x128xf32>
    %cst_10 = arith.constant 0.000000e+00 : f32
    %17 = vector.broadcast %cst_10 : f32 to vector<16x128xf32>
    %18 = arith.maximumf %16, %17 : vector<16x128xf32>
    %19 = arith.truncf %18 : vector<16x128xf32> to vector<16x128xbf16>
    %c2 = arith.constant 2 : index
    %c0_11 = arith.constant 0 : index
    %c0_12 = arith.constant 0 : index
    %20 = vector.load %arg0[%c2, %c0_11, %c0_12] : memref<3x128x128xbf16, #tpu.memory_space<vmem>>, vector<1x128x128xbf16>
    %21 = vector.shape_cast %20 : vector<1x128x128xbf16> to vector<128x128xbf16>
    %cst_13 = arith.constant dense<0.000000e+00> : vector<16x128xf32>
    %22 = tpu.matmul %19, %21, %cst_13 {dimension_numbers = #tpu.dot_dimension_numbers<[1], [0], [0], [1], [0, 0, 1, 1], [], []>} : vector<16x128xbf16>, vector<128x128xbf16>, vector<16x128xf32> -> vector<16x128xf32>
    %c18 = arith.constant 18 : index
    %c0_14 = arith.constant 0 : index
    %23 = vector.load %arg1[%c18, %c0_14] : memref<19x128xf32, #tpu.memory_space<vmem>>, vector<1x128xf32>
    %24 = vector.broadcast %23 : vector<1x128xf32> to vector<16x128xf32>
    %25 = arith.addf %22, %24 : vector<16x128xf32>
    %cst_15 = arith.constant 0.000000e+00 : f32
    %26 = vector.broadcast %cst_15 : f32 to vector<16x128xf32>
    %27 = arith.maximumf %25, %26 : vector<16x128xf32>
    %c0_16 = arith.constant 0 : index
    %c0_17 = arith.constant 0 : index
    %28 = vector.load %arg2[%c0_16, %c0_17] : memref<16x128xf32, #tpu.memory_space<vmem>>, vector<16x128xf32>
    tpu.vector_store %arg2[%c0_16, %c0_17], %27 {strides = array<i32>} : memref<16x128xf32, #tpu.memory_space<vmem>>, vector<16x128xf32>,
    return
  }
}

</mosaic_0001>

<llo_original>
// kernel: tpu_custom_call.1
$region0: #{tpu_custom_call.1}
  #allocation0 [shape = 'u32[]', space=smem, size = 0x4, offset = 0x4, fixed_abs, tag = 'smem constant byte address 0x4 - core index']
  #allocation1 [shape = 'u32[144,128]{1,0:T(1,128)}', space=vmem, size = 0x12000, scoped, tag = 'internal scratch']
  %s0 = inlined_call_operand.hbm [shape: bf16[3,128,128], index: 0, kind: input, shape index: {}]
  %s1 = inlined_call_operand.hbm [shape: f32[19,128], index: 1, kind: input, shape index: {}]
  %s2 = inlined_call_operand.hbm [shape: f32[16,128], index: 2, kind: output, shape index: {}]
  %s3 = sld [smem:[#allocation0]]
  $region26: #{tpu_custom_call.1} parent=0
    _
  %s5 = ssub.s32 1, %s3
  %s6 = scalar_select 0, %s5, %s3
  $region1: #{tpu_custom_call.1} parent=0
    #allocation2 [shape = 'u8[98304]{0}', space=vmem, size = 0x18000, scoped, tag = 'input window, operand 0, single buffered']
    #allocation3 [shape = 's32[1]{0}', space=sflag, size = 0x4, scoped, tag = 'scoped memory for tpu_custom_call.1']
    #allocation4 [shape = 's32[1]{0}', space=sflag, size = 0x4, scoped, tag = 'scoped memory for tpu_custom_call.1']
    #allocation5 [shape = 'u8[12288]{0}', space=vmem, size = 0x3000, scoped, tag = 'input window, operand 1, single buffered']
    #allocation6 [shape = 's32[1]{0}', space=sflag, size = 0x4, scoped, tag = 'scoped memory for tpu_custom_call.1']
    #allocation7 [shape = 'u8[8192]{0}', space=vmem, size = 0x2000, scoped, tag = 'output window, operand 0, single buffered']
    %7 = vsyncpa [#allocation3], 0
    %8 = vsyncpa [#allocation6], 0
    %9 = vsyncpa [#allocation4], 0
    // Predicated region
    $region2: #{tpu_custom_call.1} parent=1 // pred_check
      _
    $region3: #{tpu_custom_call.1} parent=1 // pred_check_branch
      %11 = sbr.rel (0) target = $region5
    $region4: #{tpu_custom_call.1} parent=1 // pred_region
      %s13 = ssub.s32 3072, 3072
      %14 = vsyncadd [#allocation3], %s13
      %s15 = sshll.u32 [#allocation2], 4
      %s16 = int_to_ptr.vmem [resolvable:$true] %s15
      %21 = dma.hbm_to_vmem [thread:$0]  %s0, 3072, %s16, [#allocation3], 64, 64, 4
    $region5: #{tpu_custom_call.1} parent=1 // pred_fallthru
      _
    // Predicated region
    $region6: #{tpu_custom_call.1} parent=1 // pred_check
      _
    $region7: #{tpu_custom_call.1} parent=1 // pred_check_branch
      %23 = sbr.rel (0) target = $region9
    $region8: #{tpu_custom_call.1} parent=1 // pred_region
      %s25 = ssub.s32 384, 384
      %26 = vsyncadd [#allocation6], %s25
      %s27 = sshll.u32 [#allocation5], 4
      %s28 = int_to_ptr.vmem [resolvable:$true] %s27
      %33 = dma.hbm_to_vmem [thread:$0]  %s1, 384, %s28, [#allocation6], 128, 128, 8
    $region9: #{tpu_custom_call.1} parent=1 // pred_fallthru
      _
    // Predicated region
    $region10: #{tpu_custom_call.1} parent=1 // pred_check
      _
    $region11: #{tpu_custom_call.1} parent=1 // pred_check_branch
      %35 = sbr.rel (0) target = $region13
    $region12: #{tpu_custom_call.1} parent=1 // pred_region
      %36 = dma.done [#allocation3], 3072
    $region13: #{tpu_custom_call.1} parent=1 // pred_fallthru
      _
    // Predicated region
    $region14: #{tpu_custom_call.1} parent=1 // pred_check
      _
    $region15: #{tpu_custom_call.1} parent=1 // pred_check_branch
      %38 = sbr.rel (0) target = $region17
    $region16: #{tpu_custom_call.1} parent=1 // pred_region
      %39 = dma.done [#allocation6], 384
    $region17: #{tpu_custom_call.1} parent=1 // pred_fallthru
      _
    %v41 = vld [vmem:[#allocation5] sm:$0xff]
    %v42 = vld [vmem:[#allocation5 + $0x8] sm:$0xff]
    %v43 = vpack.c.bf16 %v42, %v41
    %v44 = vld [vmem:[#allocation2] sm:$0xf]
    %v45 = vld [vmem:[#allocation2 + $0x4] sm:$0xf]
    %v46 = vld [vmem:[#allocation2 + $0x8] sm:$0xf]
    %v47 = vld [vmem:[#allocation2 + $0xc] sm:$0xf]
    %v48 = vld [vmem:[#allocation2 + $0x10] sm:$0xf]
    %v49 = vld [vmem:[#allocation2 + $0x14] sm:$0xf]
    %v50 = vld [vmem:[#allocation2 + $0x18] sm:$0xf]
    %v51 = vld [vmem:[#allocation2 + $0x1c] sm:$0xf]
    %v52 = vld [vmem:[#allocation2 + $0x20] sm:$0xf]
    %v53 = vld [vmem:[#allocation2 + $0x24] sm:$0xf]
    %v54 = vld [vmem:[#allocation2 + $0x28] sm:$0xf]
    %v55 = vld [vmem:[#allocation2 + $0x2c] sm:$0xf]
    %v56 = vld [vmem:[#allocation2 + $0x30] sm:$0xf]
    %v57 = vld [vmem:[#allocation2 + $0x34] sm:$0xf]
    %v58 = vld [vmem:[#allocation2 + $0x38] sm:$0xf]
    %v59 = vld [vmem:[#allocation2 + $0x3c] sm:$0xf]
    %v60 = vld [vmem:[#allocation5 + $0x10] sm:$0x1]
    %v61 = vlaneseq
    %v62 = vshrl.u32 %v61, 7
    %v63 = vsub.s32 0, %v62
    %v64 = vrot.slane %v60, %v63
    %v81 = vunpack.c.l.b16 %v44
    %v82 = vunpack.c.l.b16 %v45
    %v83 = vunpack.c.l.b16 %v46
    %v84 = vunpack.c.l.b16 %v47
    %v85 = vunpack.c.l.b16 %v48
    %v86 = vunpack.c.l.b16 %v49
    %v87 = vunpack.c.l.b16 %v50
    %v88 = vunpack.c.l.b16 %v51
    %v89 = vunpack.c.l.b16 %v52
    %v90 = vunpack.c.l.b16 %v53
    %v91 = vunpack.c.l.b16 %v54
    %v92 = vunpack.c.l.b16 %v55
    %v93 = vunpack.c.l.b16 %v56
    %v94 = vunpack.c.l.b16 %v57
    %v95 = vunpack.c.l.b16 %v58
    %v96 = vunpack.c.l.b16 %v59
    %v97 = vpack.c.b16 %v82, %v81
    %v98 = vpack.c.b16 %v84, %v83
    %v99 = vpack.c.b16 %v86, %v85
    %v100 = vpack.c.b16 %v88, %v87
    %v101 = vpack.c.b16 %v90, %v89
    %v102 = vpack.c.b16 %v92, %v91
    %v103 = vpack.c.b16 %v94, %v93
    %v104 = vpack.c.b16 %v96, %v95
    %113 = vmatprep.subr.bf16.mxu0 0
    %114 = vmatpush1.bf16.msra.mxu0 %v104
    %115 = vmatprep.subr.bf16.mxu0 0
    %116 = vmatpush1.bf16.msra.mxu0 %v103
    %117 = vmatprep.subr.bf16.mxu0 0
    %118 = vmatpush1.bf16.msra.mxu0 %v102
    %119 = vmatprep.subr.bf16.mxu0 0
    %120 = vmatpush1.bf16.msra.mxu0 %v101
    %121 = vmatprep.subr.bf16.mxu0 0
    %122 = vmatpush1.bf16.msra.mxu0 %v100
    %123 = vmatprep.subr.bf16.mxu0 0
    %124 = vmatpush1.bf16.msra.mxu0 %v99
    %125 = vmatprep.subr.bf16.mxu0 0
    %126 = vmatpush1.bf16.msra.mxu0 %v98
    %127 = vmatprep.subr.bf16.mxu0 0
    %128 = vmatpush1.bf16.msra.mxu0 %v97
    %129 = vmatprep.subr.bf16.mxu0 0
    %130 = vmatpush2.bf16.msra.mxu0 0
    %131 = vmatprep.subr.bf16.mxu0 0
    %132 = vmatpush2.bf16.msra.mxu0 0
    %133 = vmatprep.subr.bf16.mxu0 0
    %134 = vmatpush2.bf16.msra.mxu0 0
    %135 = vmatprep.subr.bf16.mxu0 0
    %136 = vmatpush2.bf16.msra.mxu0 0
    %137 = vmatprep.subr.bf16.mxu0 0
    %138 = vmatpush2.bf16.msra.mxu0 0
    %139 = vmatprep.subr.bf16.mxu0 0
    %140 = vmatpush2.bf16.msra.mxu0 0
    %141 = vmatprep.subr.bf16.mxu0 0
    %142 = vmatpush2.bf16.msra.mxu0 0
    %143 = vmatprep.subr.bf16.mxu0 0
    %144 = vmatpush2.bf16.msra.mxu0 0
    %145 = vmatprep.mubr.bf16.mxu0 0
    %146 = vmatmul.mubr.bf16.gmra.mxu0 %v43
    %v147 = vpop.f32.mrf.mxu0
    %v148 = vadd.f32 %v64, %v147
    %v149 = vpop.f32.mrf.mxu0
    %v150 = vpop.f32.mrf.mxu0
    %v151 = vadd.f32 %v64, %v150
    %v152 = vpop.f32.mrf.mxu0
    %153 = vdwg.mxu0
    %v154 = vmax.f32 %v148, 0.0
    %v155 = vmax.f32 %v151, 0.0
    %v156 = vpack.c.bf16 %v155, %v154
    %s157 = scalar_lea.vmem [#allocation2], 64
    %v158 = vld [vmem:[%s157] sm:$0xf]
    %v159 = vld [vmem:[%s157 + $0x4] sm:$0xf]
    %v160 = vld [vmem:[%s157 + $0x8] sm:$0xf]
    %v161 = vld [vmem:[%s157 + $0xc] sm:$0xf]
    %v162 = vld [vmem:[%s157 + $0x10] sm:$0xf]
    %v163 = vld [vmem:[%s157 + $0x14] sm:$0xf]
    %v164 = vld [vmem:[%s157 + $0x18] sm:$0xf]
    %v165 = vld [vmem:[%s157 + $0x1c] sm:$0xf]
    %v166 = vld [vmem:[%s157 + $0x20] sm:$0xf]
    %v167 = vld [vmem:[%s157 + $0x24] sm:$0xf]
    %v168 = vld [vmem:[%s157 + $0x28] sm:$0xf]
    %v169 = vld [vmem:[%s157 + $0x2c] sm:$0xf]
    %v170 = vld [vmem:[%s157 + $0x30] sm:$0xf]
    %v171 = vld [vmem:[%s157 + $0x34] sm:$0xf]
    %v172 = vld [vmem:[%s157 + $0x38] sm:$0xf]
    %v173 = vld [vmem:[%s157 + $0x3c] sm:$0xf]
    %v174 = vld [vmem:[#allocation5 + $0x11] sm:$0x1]
    %v175 = vlaneseq
    %v176 = vshrl.u32 %v175, 7
    %v177 = vsub.s32 0, %v176
    %v178 = vrot.slane %v174, %v177
    %v195 = vunpack.c.l.b16 %v158
    %v196 = vunpack.c.l.b16 %v159
    %v197 = vunpack.c.l.b16 %v160
    %v198 = vunpack.c.l.b16 %v161
    %v199 = vunpack.c.l.b16 %v162
    %v200 = vunpack.c.l.b16 %v163
    %v201 = vunpack.c.l.b16 %v164
    %v202 = vunpack.c.l.b16 %v165
    %v203 = vunpack.c.l.b16 %v166
    %v204 = vunpack.c.l.b16 %v167
    %v205 = vunpack.c.l.b16 %v168
    %v206 = vunpack.c.l.b16 %v169
    %v207 = vunpack.c.l.b16 %v170
    %v208 = vunpack.c.l.b16 %v171
    %v209 = vunpack.c.l.b16 %v172
    %v210 = vunpack.c.l.b16 %v173
    %v211 = vpack.c.b16 %v196, %v195
    %v212 = vpack.c.b16 %v198, %v197
    %v213 = vpack.c.b16 %v200, %v199
    %v214 = vpack.c.b16 %v202, %v201
    %v215 = vpack.c.b16 %v204, %v203
    %v216 = vpack.c.b16 %v206, %v205
    %v217 = vpack.c.b16 %v208, %v207
    %v218 = vpack.c.b16 %v210, %v209
    %227 = vmatprep.subr.bf16.mxu0 0
    %228 = vmatpush1.bf16.msra.mxu0 %v218
    %229 = vmatprep.subr.bf16.mxu0 0
    %230 = vmatpush1.bf16.msra.mxu0 %v217
    %231 = vmatprep.subr.bf16.mxu0 0
    %232 = vmatpush1.bf16.msra.mxu0 %v216
    %233 = vmatprep.subr.bf16.mxu0 0
    %234 = vmatpush1.bf16.msra.mxu0 %v215
    %235 = vmatprep.subr.bf16.mxu0 0
    %236 = vmatpush1.bf16.msra.mxu0 %v214
    %237 = vmatprep.subr.bf16.mxu0 0
    %238 = vmatpush1.bf16.msra.mxu0 %v213
    %239 = vmatprep.subr.bf16.mxu0 0
    %240 = vmatpush1.bf16.msra.mxu0 %v212
    %241 = vmatprep.subr.bf16.mxu0 0
    %242 = vmatpush1.bf16.msra.mxu0 %v211
    %243 = vmatprep.subr.bf16.mxu0 0
    %244 = vmatpush2.bf16.msra.mxu0 0
    %245 = vmatprep.subr.bf16.mxu0 0
    %246 = vmatpush2.bf16.msra.mxu0 0
    %247 = vmatprep.subr.bf16.mxu0 0
    %248 = vmatpush2.bf16.msra.mxu0 0
    %249 = vmatprep.subr.bf16.mxu0 0
    %250 = vmatpush2.bf16.msra.mxu0 0
    %251 = vmatprep.subr.bf16.mxu0 0
    %252 = vmatpush2.bf16.msra.mxu0 0
    %253 = vmatprep.subr.bf16.mxu0 0
    %254 = vmatpush2.bf16.msra.mxu0 0
    %255 = vmatprep.subr.bf16.mxu0 0
    %256 = vmatpush2.bf16.msra.mxu0 0
    %257 = vmatprep.subr.bf16.mxu0 0
    %258 = vmatpush2.bf16.msra.mxu0 0
    %259 = vmatprep.mubr.bf16.mxu0 0
    %260 = vmatmul.mubr.bf16.gmra.mxu0 %v156
    %v261 = vpop.f32.mrf.mxu0
    %v262 = vadd.f32 %v178, %v261
    %v263 = vpop.f32.mrf.mxu0
    %v264 = vpop.f32.mrf.mxu0
    %v265 = vadd.f32 %v178, %v264
    %v266 = vpop.f32.mrf.mxu0
    %267 = vdwg.mxu0
    %v268 = vmax.f32 %v262, 0.0
    %v269 = vmax.f32 %v265, 0.0
    %v270 = vpack.c.bf16 %v269, %v268
    %s271 = scalar_lea.vmem [#allocation2], 128
    %v272 = vld [vmem:[%s271] sm:$0xf]
    %v273 = vld [vmem:[%s271 + $0x4] sm:$0xf]
    %v274 = vld [vmem:[%s271 + $0x8] sm:$0xf]
    %v275 = vld [vmem:[%s271 + $0xc] sm:$0xf]
    %v276 = vld [vmem:[%s271 + $0x10] sm:$0xf]
    %v277 = vld [vmem:[%s271 + $0x14] sm:$0xf]
    %v278 = vld [vmem:[%s271 + $0x18] sm:$0xf]
    %v279 = vld [vmem:[%s271 + $0x1c] sm:$0xf]
    %v280 = vld [vmem:[%s271 + $0x20] sm:$0xf]
    %v281 = vld [vmem:[%s271 + $0x24] sm:$0xf]
    %v282 = vld [vmem:[%s271 + $0x28] sm:$0xf]
    %v283 = vld [vmem:[%s271 + $0x2c] sm:$0xf]
    %v284 = vld [vmem:[%s271 + $0x30] sm:$0xf]
    %v285 = vld [vmem:[%s271 + $0x34] sm:$0xf]
    %v286 = vld [vmem:[%s271 + $0x38] sm:$0xf]
    %v287 = vld [vmem:[%s271 + $0x3c] sm:$0xf]
    %v288 = vld [vmem:[#allocation5 + $0x12] sm:$0x1]
    %v289 = vlaneseq
    %v290 = vshrl.u32 %v289, 7
    %v291 = vsub.s32 0, %v290
    %v292 = vrot.slane %v288, %v291
    %v309 = vunpack.c.l.b16 %v272
    %v310 = vunpack.c.l.b16 %v273
    %v311 = vunpack.c.l.b16 %v274
    %v312 = vunpack.c.l.b16 %v275
    %v313 = vunpack.c.l.b16 %v276
    %v314 = vunpack.c.l.b16 %v277
    %v315 = vunpack.c.l.b16 %v278
    %v316 = vunpack.c.l.b16 %v279
    %v317 = vunpack.c.l.b16 %v280
    %v318 = vunpack.c.l.b16 %v281
    %v319 = vunpack.c.l.b16 %v282
    %v320 = vunpack.c.l.b16 %v283
    %v321 = vunpack.c.l.b16 %v284
    %v322 = vunpack.c.l.b16 %v285
    %v323 = vunpack.c.l.b16 %v286
    %v324 = vunpack.c.l.b16 %v287
    %v325 = vpack.c.b16 %v310, %v309
    %v326 = vpack.c.b16 %v312, %v311
    %v327 = vpack.c.b16 %v314, %v313
    %v328 = vpack.c.b16 %v316, %v315
    %v329 = vpack.c.b16 %v318, %v317
    %v330 = vpack.c.b16 %v320, %v319
    %v331 = vpack.c.b16 %v322, %v321
    %v332 = vpack.c.b16 %v324, %v323
    %341 = vmatprep.subr.bf16.mxu0 0
    %342 = vmatpush1.bf16.msra.mxu0 %v332
    %343 = vmatprep.subr.bf16.mxu0 0
    %344 = vmatpush1.bf16.msra.mxu0 %v331
    %345 = vmatprep.subr.bf16.mxu0 0
    %346 = vmatpush1.bf16.msra.mxu0 %v330
    %347 = vmatprep.subr.bf16.mxu0 0
    %348 = vmatpush1.bf16.msra.mxu0 %v329
    %349 = vmatprep.subr.bf16.mxu0 0
    %350 = vmatpush1.bf16.msra.mxu0 %v328
    %351 = vmatprep.subr.bf16.mxu0 0
    %352 = vmatpush1.bf16.msra.mxu0 %v327
    %353 = vmatprep.subr.bf16.mxu0 0
    %354 = vmatpush1.bf16.msra.mxu0 %v326
    %355 = vmatprep.subr.bf16.mxu0 0
    %356 = vmatpush1.bf16.msra.mxu0 %v325
    %357 = vmatprep.subr.bf16.mxu0 0
    %358 = vmatpush2.bf16.msra.mxu0 0
    %359 = vmatprep.subr.bf16.mxu0 0
    %360 = vmatpush2.bf16.msra.mxu0 0
    %361 = vmatprep.subr.bf16.mxu0 0
    %362 = vmatpush2.bf16.msra.mxu0 0
    %363 = vmatprep.subr.bf16.mxu0 0
    %364 = vmatpush2.bf16.msra.mxu0 0
    %365 = vmatprep.subr.bf16.mxu0 0
    %366 = vmatpush2.bf16.msra.mxu0 0
    %367 = vmatprep.subr.bf16.mxu0 0
    %368 = vmatpush2.bf16.msra.mxu0 0
    %369 = vmatprep.subr.bf16.mxu0 0
    %370 = vmatpush2.bf16.msra.mxu0 0
    %371 = vmatprep.subr.bf16.mxu0 0
    %372 = vmatpush2.bf16.msra.mxu0 0
    %373 = vmatprep.mubr.bf16.mxu0 0
    %374 = vmatmul.mubr.bf16.gmra.mxu0 %v270
    %v375 = vpop.f32.mrf.mxu0
    %v376 = vadd.f32 %v292, %v375
    %v377 = vpop.f32.mrf.mxu0
    %v378 = vpop.f32.mrf.mxu0
    %v379 = vadd.f32 %v292, %v378
    %v380 = vpop.f32.mrf.mxu0
    %381 = vdwg.mxu0
    %v382 = vmax.f32 %v376, 0.0
    %v383 = vmax.f32 %v379, 0.0
    %384 = vst [vmem:[#allocation7] sm:$0xff] %v382
    %385 = vst [vmem:[#allocation7 + $0x8] sm:$0xff] %v383
    // Predicated region
    $region18: #{tpu_custom_call.1} parent=1 // pred_check
      _
    $region19: #{tpu_custom_call.1} parent=1 // pred_check_branch
      %387 = sbr.rel (0) target = $region21
    $region20: #{tpu_custom_call.1} parent=1 // pred_region
      %s389 = ssub.s32 256, 256
      %390 = vsyncadd [#allocation4], %s389
      %s391 = sshll.u32 [#allocation7], 4
      %s392 = int_to_ptr.vmem [resolvable:$true] %s391
      %397 = dma.vmem_to_hbm [thread:$0]  %s392, 256, %s2, [#allocation4], 128, 128, 8
    $region21: #{tpu_custom_call.1} parent=1 // pred_fallthru
      _
    // Predicated region
    $region22: #{tpu_custom_call.1} parent=1 // pred_check
      _
    $region23: #{tpu_custom_call.1} parent=1 // pred_check_branch
      %399 = sbr.rel (0) target = $region25
    $region24: #{tpu_custom_call.1} parent=1 // pred_region
      %400 = dma.done [#allocation4], 256
    $region25: #{tpu_custom_call.1} parent=1 // pred_fallthru
      _
    %401 = vsyncpa [#allocation3], 1
    %402 = vsyncpa [#allocation6], 1
    %403 = vsyncpa [#allocation4], 1

</llo_original>
